<compile_context>
chip_gen: v7x
topology: tpu7x:2x2x1
jax: 0.10.0
libtpu: 0.0.40
codegen_flags: <defaults>
</compile_context>

<pallas_src>
import jax
import jax.numpy as jnp
import numpy as np
from jax.experimental import pallas as pl
from jax.experimental.pallas import tpu as pltpu


def _fast_recip(x):
    # EUP approximate reciprocal + one Newton-Raphson refinement: ~f32 accurate,
    # keeps the divide off the (binding) VALU slot and on the otherwise-idle EUP.
    r = pl.reciprocal(x, approx=True)
    return r * (2.0 - x * r)


def _make_kernel(num_layers, n_neighbors):
    """Kernel for one (batch, N-tile) grid cell, channels-first layout."""

    def kernel(*refs):
        (xyz_few_ref,        # (1, S, 3)        f32
         xyz_largeT_ref,     # (1, 3, TILE_N)   f32
         feat_largeT_ref,    # (1, Dl, TILE_N)  mm_dtype
         w1s_ref,            # (1, C1, Dl+S)    mm_dtype  == [W1a' | W1b' @ ff.T]
         b1_ref) = refs[:5]  # (C1, 1)          f32
        layer_refs = refs[5:5 + 2 * (num_layers - 1)]
        out_ref = refs[5 + 2 * (num_layers - 1)]   # (1, c_last, TILE_N)

        xf = xyz_few_ref[0]          # (S, 3)
        xlT = xyz_largeT_ref[0]      # (3, TILE_N)
        flT = feat_largeT_ref[0]     # (Dl, TILE_N)  mm_dtype
        mm_dtype = flT.dtype

        S = xf.shape[0]
        tile_n = xlT.shape[1]

        # ---- squared distances (S, TILE_N): lane-dense over N, pure VPU ----
        dT = jnp.zeros((S, tile_n), jnp.float32)
        for c in range(3):
            diff = xf[:, c:c + 1] - xlT[c:c + 1, :]     # (S,1) - (1,TILE_N)
            dT = dT + diff * diff

        # ---- 3-NN inverse-distance weights as dense (S, TILE_N) matrix ----
        # Pick the n smallest distances per column (stable first-index tie
        # break to match torch.sort) and scatter reciprocal weights; the
        # feature gather then becomes part of the single layer-1 matmul.
        row_ids = jax.lax.broadcasted_iota(jnp.int32, (S, tile_n), 0)
        d = dT
        wmatT = jnp.zeros((S, tile_n), jnp.float32)
        recip_sum = jnp.zeros((1, tile_n), jnp.float32)
        for _ in range(n_neighbors):
            dmin = jnp.min(d, axis=0, keepdims=True)                     # (1, TILE_N)
            idx = jnp.min(jnp.where(d == dmin, row_ids, S),
                          axis=0, keepdims=True)                         # (1, TILE_N)
            is_min = row_ids == idx                                      # (S, TILE_N) bool
            r = _fast_recip(dmin + 1e-08)
            wmatT = wmatT + jnp.where(is_min, r, 0.0)
            recip_sum = recip_sum + r
            d = jnp.where(is_min, jnp.inf, d)
        wmatT = wmatT * _fast_recip(recip_sum)

        # ---- fused layer 1: ONE K=(Dl+S) matmul on the MXU ----
        # x1 = [W1a' | W1b' ff.T] @ [flT ; wmatT] + b1'
        rhs = jnp.concatenate([flT, wmatT.astype(mm_dtype)], axis=0)     # (Dl+S, TILE_N)
        x = jnp.dot(w1s_ref[0], rhs, preferred_element_type=jnp.float32)
        x = jnp.maximum(x + b1_ref[...], 0.0)                            # (C1, TILE_N) f32

        # ---- remaining pointwise MLP layers (BN + bias folded) ----
        for i in range(num_layers - 1):
            w = layer_refs[2 * i][...]          # (Cout, Cin)  mm_dtype
            b = layer_refs[2 * i + 1][...]      # (Cout, 1)    f32
            x = jnp.dot(w, x.astype(mm_dtype),
                        preferred_element_type=jnp.float32) + b
            x = jnp.maximum(x, 0.0)

        out_ref[0] = x.astype(out_ref.dtype)    # lane-dense (c_last, TILE_N)

    return kernel


def _round_up(v, m):
    return ((v + m - 1) // m) * m


def _pick_tile_n(N, B, requested):
    """Largest 128-multiple tile <= requested that keeps B * n_tiles >= 8 grid
    steps (2 v7x TensorCores x a few steps each for pipelining)."""
    t = min(_round_up(max(requested, 128), 128), _round_up(N, 128))
    while t > 128 and B * ((N + t - 1) // t) < 8:
        t = _round_up(max(t // 2, 128), 128)
    return t


def _vmem_limit_bytes(S, tile_n, dl, c1, c_last, folded, mm_bytes):
    """Rough VMEM budget (bytes) for compiler_params."""
    f32 = 4
    io = 2 * (S * 3 * f32 + 3 * tile_n * f32 + dl * tile_n * mm_bytes
              + c1 * (dl + S) * mm_bytes + c_last * tile_n * f32)
    weights = 2 * sum(int(np.prod(w.shape)) * mm_bytes + int(w.shape[0]) * f32
                      for w, _ in folded)
    cmax = max([c1, c_last, dl + S] + [int(w.shape[0]) for w, _ in folded])
    temps = f32 * ((4 * S + 8) * tile_n + 3 * cmax * tile_n)
    est = io + weights + temps
    # stay within v7x's 32 MiB default scoped VMEM (64 MiB physical);
    # v5e/v6e have plenty of headroom either way at these tile sizes.
    return int(min(32 * 1024 * 1024, max(8 * 1024 * 1024, 2 * est)))


def feature_propagation(point_xyz_few, point_feature_few,
                        point_xyz_large, point_feature_large, params,
                        *, tile_n=1024, matmul_dtype=jnp.float32):
    """params: list of (conv_w (Cout,Cin), conv_b (Cout,), bn_scale (Cout,), bn_shift (Cout,)).

    Returns (B, C_out, N) exactly like the PyTorch module (inference-mode BN).
    `matmul_dtype=jnp.bfloat16` casts only the matmul operands (featT / weights);
    distance, NN-selection and the bias+ReLU epilogue stay in f32.
    """
    B, N, _ = point_xyz_large.shape
    _, S, _ = point_xyz_few.shape
    if point_feature_large is None:
        # TODO(synk): point_feature_large is None branch (interp-only input) not implemented.
        raise NotImplementedError("point_feature_large=None path not implemented")
    Dl = point_feature_large.shape[-1]
    num_layers = len(params)
    c_last = params[-1][0].shape[0]

    if S == 1:
        # TODO(synk): S == 1 branch (pure repeat of point_feature_few) not fused into the kernel.
        raise NotImplementedError("S == 1 repeat path not implemented in the Pallas kernel")
    n_neighbors = min(3, S)
    mm_bytes = np.dtype(matmul_dtype).itemsize

    # ---- fold inference-mode BN (scale/shift) + conv bias into the weights ----
    folded = []
    for (w, bias, sc, sh) in params:
        folded.append((sc[:, None] * w, sc * bias + sh))

    w1, b1 = folded[0]
    c1 = w1.shape[0]
    w1a = w1[:, :Dl]                                   # (C1, Dl)
    w1b = w1[:, Dl:]                                   # (C1, Df)
    # Stacked per-batch first-layer weight [W1a' | W1b' @ feat_few.T]: (B, C1, Dl+S)
    ffw1T = jnp.einsum("od,bsd->bos", w1b, point_feature_few)
    w1s = jnp.concatenate(
        [jnp.broadcast_to(w1a[None], (B, c1, Dl)), ffw1T], axis=2).astype(matmul_dtype)

    # ---- channels-first inputs for the large point cloud, padded to TILE_N ----
    tile_n = _pick_tile_n(N, B, tile_n)
    n_tiles = (N + tile_n - 1) // tile_n
    n_pad = n_tiles * tile_n
    xyzT = jnp.transpose(point_xyz_large, (0, 2, 1)).astype(jnp.float32)     # (B, 3, N)
    featT = jnp.transpose(point_feature_large, (0, 2, 1)).astype(matmul_dtype)  # (B, Dl, N)
    if n_pad != N:
        pad = n_pad - N
        xyzT = jnp.pad(xyzT, ((0, 0), (0, 0), (0, pad)))
        featT = jnp.pad(featT, ((0, 0), (0, 0), (0, pad)))

    in_specs = [
        pl.BlockSpec((1, S, 3), lambda b, n: (b, 0, 0)),          # resident per batch
        pl.BlockSpec((1, 3, tile_n), lambda b, n: (b, 0, n)),
        pl.BlockSpec((1, Dl, tile_n), lambda b, n: (b, 0, n)),
        pl.BlockSpec((1, c1, Dl + S), lambda b, n: (b, 0, 0)),    # resident per batch
        pl.BlockSpec((c1, 1), lambda b, n: (0, 0)),
    ]
    args = [point_xyz_few.astype(jnp.float32), xyzT, featT, w1s,
            b1.astype(jnp.float32).reshape(c1, 1)]
    for (w, b) in folded[1:]:
        cout = w.shape[0]
        args += [w.astype(matmul_dtype), b.astype(jnp.float32).reshape(cout, 1)]
        in_specs += [
            pl.BlockSpec(w.shape, lambda b_, n_: (0, 0)),
            pl.BlockSpec((cout, 1), lambda b_, n_: (0, 0)),
        ]

    vmem_bytes = _vmem_limit_bytes(S, tile_n, Dl, c1, c_last, folded, mm_bytes)

    out = pl.pallas_call(
        _make_kernel(num_layers, n_neighbors),
        out_shape=jax.ShapeDtypeStruct((B, c_last, n_pad), jnp.float32),
        grid=(B, n_tiles),
        in_specs=in_specs,
        out_specs=pl.BlockSpec((1, c_last, tile_n), lambda b, n: (b, 0, n)),
        compiler_params=pltpu.CompilerParams(
            dimension_semantics=("parallel", "parallel"),
            vmem_limit_bytes=vmem_bytes),
    )(*args)

    # output is already (B, C_out, N) lane-dense; just drop padding if any.
    return out[:, :, :N] if n_pad != N else out


def _reference(point_xyz_few, point_feature_few, point_xyz_large,
               point_feature_large, params):
    """Pure-JAX reference mirroring the PyTorch forward (inference-mode BN)."""
    diff = point_xyz_large[:, :, None, :] - point_xyz_few[:, None, :, :]
    d = jnp.sum(diff * diff, axis=-1)                                    # (B, N, S)
    idx = jnp.argsort(d, axis=-1)[:, :, :3]                              # (B, N, 3)
    dists = jnp.take_along_axis(d, idx, axis=-1)                         # (B, N, 3)
    recip = 1.0 / (dists + 1e-08)
    weight = recip / jnp.sum(recip, axis=-1, keepdims=True)
    gathered = jax.vmap(lambda f, i: f[i])(point_feature_few, idx)       # (B, N, 3, Df)
    interp = jnp.sum(gathered * weight[..., None], axis=2)               # (B, N, Df)
    x = jnp.concatenate([point_feature_large, interp], axis=-1)          # (B, N, C)
    for (w, bias, sc, sh) in params:
        x = jnp.einsum("bnc,oc->bno", x, w) + bias
        x = x * sc + sh
        x = jnp.maximum(x, 0.0)
    return jnp.transpose(x, (0, 2, 1))


def _make_params(key, in_channel, hidden_dim):
    params = []
    last = in_channel
    for out_c in hidden_dim:
        k1, k2, k3, k4, key = jax.random.split(key, 5)
        w = jax.random.normal(k1, (out_c, last), jnp.float32) * 0.1      # Conv1d weight (k=1)
        b = jax.random.normal(k2, (out_c,), jnp.float32) * 0.05          # Conv1d bias
        gamma = 1.0 + 0.1 * jax.random.normal(k3, (out_c,), jnp.float32)
        beta = 0.05 * jax.random.normal(k4, (out_c,), jnp.float32)
        running_mean = jnp.zeros((out_c,), jnp.float32)
        running_var = jnp.ones((out_c,), jnp.float32)
        scale = gamma / jnp.sqrt(running_var + 1e-5)
        shift = beta - running_mean * scale
        params.append((w, b, scale, shift))
        last = out_c
    return params


if __name__ == "__main__":
    B, N, S = 2, 256, 8
    D_few, D_large = 8, 8
    hidden_dim = (32, 16)
    in_channel = D_large + D_few

    key = jax.random.PRNGKey(0)
    k1, k2, k3, k4, kp = jax.random.split(key, 5)
    point_xyz_few = jax.random.normal(k1, (B, S, 3), jnp.float32)
    point_feature_few = jax.random.normal(k2, (B, S, D_few), jnp.float32)
    point_xyz_large = jax.random.normal(k3, (B, N, 3), jnp.float32)
    point_feature_large = jax.random.normal(k4, (B, N, D_large), jnp.float32)

    params = _make_params(kp, in_channel, hidden_dim)

    ref = _reference(point_xyz_few, point_feature_few,
                     point_xyz_large, point_feature_large, params)

    # f32 path: strict tolerance vs. the pure-JAX reference.
    out = feature_propagation(point_xyz_few, point_feature_few,
                              point_xyz_large, point_feature_large, params)
    out = jax.block_until_ready(out)
    assert out.shape == (B, hidden_dim[-1], N), out.shape
    np.testing.assert_allclose(np.asarray(out), np.asarray(ref),
                               rtol=1e-4, atol=1e-4)

    # bf16 matmul-operand path (v6e / v7x suggestion): looser tolerance.
    out_bf16 = feature_propagation(point_xyz_few, point_feature_few,
                                   point_xyz_large, point_feature_large, params,
                                   matmul_dtype=jnp.bfloat16)
    out_bf16 = jax.block_until_ready(out_bf16)
    np.testing.assert_allclose(np.asarray(out_bf16), np.asarray(ref),
                               rtol=5e-2, atol=5e-2)

    print("KERNEL_OK")
</pallas_src>

<mosaic_0001>
module attributes {stable_mosaic.version = 11 : i64} {
  func.func @kernel(%arg0: i32, %arg1: i32, %arg2: memref<1x8x3xf32, #tpu.memory_space<vmem>>, %arg3: memref<1x3x128xf32, #tpu.memory_space<vmem>>, %arg4: memref<1x8x128xf32, #tpu.memory_space<vmem>>, %arg5: memref<1x32x16xf32, #tpu.memory_space<vmem>>, %arg6: memref<32x1xf32, #tpu.memory_space<vmem>>, %arg7: memref<16x32xf32, #tpu.memory_space<vmem>>, %arg8: memref<16x1xf32, #tpu.memory_space<vmem>>, %arg9: memref<1x16x128xf32, #tpu.memory_space<vmem>>) attributes {dimension_semantics = [#tpu.dimension_semantics<parallel>, #tpu.dimension_semantics<parallel>], iteration_bounds = array<i64: 2, 2>, scalar_prefetch = 0 : i64, scratch_operands = 0 : i64, tpu.core_type = #tpu.core_type<tc>, window_params = [{transform_indices = @transform_0, window_bounds = array<i64: 1, 8, 3>}, {transform_indices = @transform_1, window_bounds = array<i64: 1, 3, 128>}, {transform_indices = @transform_2, window_bounds = array<i64: 1, 8, 128>}, {transform_indices = @transform_3, window_bounds = array<i64: 1, 32, 16>}, {pipeline_mode = #tpu.pipeline_mode<synchronous>, transform_indices = @transform_4, window_bounds = array<i64: 32, 1>}, {pipeline_mode = #tpu.pipeline_mode<synchronous>, transform_indices = @transform_5, window_bounds = array<i64: 16, 32>}, {pipeline_mode = #tpu.pipeline_mode<synchronous>, transform_indices = @transform_6, window_bounds = array<i64: 16, 1>}, {transform_indices = @transform_7, window_bounds = array<i64: 1, 16, 128>}]} {
    %c0 = arith.constant 0 : index
    %c0_0 = arith.constant 0 : index
    %c0_1 = arith.constant 0 : index
    %0 = vector.load %arg2[%c0, %c0_0, %c0_1] : memref<1x8x3xf32, #tpu.memory_space<vmem>>, vector<1x8x3xf32>
    %1 = vector.shape_cast %0 : vector<1x8x3xf32> to vector<8x3xf32>
    %c0_2 = arith.constant 0 : index
    %c0_3 = arith.constant 0 : index
    %c0_4 = arith.constant 0 : index
    %2 = vector.load %arg3[%c0_2, %c0_3, %c0_4] : memref<1x3x128xf32, #tpu.memory_space<vmem>>, vector<1x3x128xf32>
    %3 = vector.shape_cast %2 : vector<1x3x128xf32> to vector<3x128xf32>
    %c0_5 = arith.constant 0 : index
    %c0_6 = arith.constant 0 : index
    %c0_7 = arith.constant 0 : index
    %4 = vector.load %arg4[%c0_5, %c0_6, %c0_7] : memref<1x8x128xf32, #tpu.memory_space<vmem>>, vector<1x8x128xf32>
    %5 = vector.shape_cast %4 : vector<1x8x128xf32> to vector<8x128xf32>
    %cst = arith.constant 0.000000e+00 : f32
    %6 = vector.broadcast %cst : f32 to vector<8x128xf32>
    %7 = vector.extract_strided_slice %1 {offsets = [0, 0], sizes = [8, 1], strides = [1, 1]} : vector<8x3xf32> to vector<8x1xf32>
    %8 = vector.extract_strided_slice %3 {offsets = [0, 0], sizes = [1, 128], strides = [1, 1]} : vector<3x128xf32> to vector<1x128xf32>
    %9 = vector.broadcast %7 : vector<8x1xf32> to vector<8x128xf32>
    %10 = vector.broadcast %8 : vector<1x128xf32> to vector<8x128xf32>
    %11 = arith.subf %9, %10 : vector<8x128xf32>
    %12 = arith.mulf %11, %11 : vector<8x128xf32>
    %13 = arith.addf %6, %12 : vector<8x128xf32>
    %14 = vector.extract_strided_slice %1 {offsets = [0, 1], sizes = [8, 1], strides = [1, 1]} : vector<8x3xf32> to vector<8x1xf32>
    %15 = vector.extract_strided_slice %3 {offsets = [1, 0], sizes = [1, 128], strides = [1, 1]} : vector<3x128xf32> to vector<1x128xf32>
    %16 = vector.broadcast %14 : vector<8x1xf32> to vector<8x128xf32>
    %17 = vector.broadcast %15 : vector<1x128xf32> to vector<8x128xf32>
    %18 = arith.subf %16, %17 : vector<8x128xf32>
    %19 = arith.mulf %18, %18 : vector<8x128xf32>
    %20 = arith.addf %13, %19 : vector<8x128xf32>
    %21 = vector.extract_strided_slice %1 {offsets = [0, 2], sizes = [8, 1], strides = [1, 1]} : vector<8x3xf32> to vector<8x1xf32>
    %22 = vector.extract_strided_slice %3 {offsets = [2, 0], sizes = [1, 128], strides = [1, 1]} : vector<3x128xf32> to vector<1x128xf32>
    %23 = vector.broadcast %21 : vector<8x1xf32> to vector<8x128xf32>
    %24 = vector.broadcast %22 : vector<1x128xf32> to vector<8x128xf32>
    %25 = arith.subf %23, %24 : vector<8x128xf32>
    %26 = arith.mulf %25, %25 : vector<8x128xf32>
    %27 = arith.addf %20, %26 : vector<8x128xf32>
    %28 = tpu.iota {dimensions = array<i32: 0>} : vector<8x128xi32>
    %cst_8 = arith.constant 0.000000e+00 : f32
    %29 = vector.broadcast %cst_8 : f32 to vector<8x128xf32>
    %cst_9 = arith.constant 0.000000e+00 : f32
    %30 = vector.broadcast %cst_9 : f32 to vector<1x128xf32>
    %cst_10 = arith.constant dense<0x7F800000> : vector<128xf32>
    %31 = vector.multi_reduction <minimumf>, %27, %cst_10 [0] : vector<8x128xf32> to vector<128xf32>
    %32 = vector.shape_cast %31 : vector<128xf32> to vector<1x128xf32>
    %33 = vector.broadcast %32 : vector<1x128xf32> to vector<8x128xf32>
    %34 = arith.cmpf oeq, %27, %33 : vector<8x128xf32>
    %c8_i32 = arith.constant 8 : i32
    %35 = vector.broadcast %c8_i32 : i32 to vector<8x128xi32>
    %36 = arith.select %34, %28, %35 : vector<8x128xi1>, vector<8x128xi32>
    %cst_11 = arith.constant dense<2147483647> : vector<128xi32>
    %37 = vector.multi_reduction <minsi>, %36, %cst_11 [0] : vector<8x128xi32> to vector<128xi32>
    %38 = vector.shape_cast %37 : vector<128xi32> to vector<1x128xi32>
    %39 = vector.broadcast %38 : vector<1x128xi32> to vector<8x128xi32>
    %40 = arith.cmpi eq, %28, %39 : vector<8x128xi32>
    %cst_12 = arith.constant 9.99999993E-9 : f32
    %41 = vector.broadcast %cst_12 : f32 to vector<1x128xf32>
    %42 = arith.addf %32, %41 : vector<1x128xf32>
    %43 = tpu.reciprocal %42 {approx = true} : vector<1x128xf32> -> vector<1x128xf32>
    %44 = arith.mulf %42, %43 : vector<1x128xf32>
    %cst_13 = arith.constant 2.000000e+00 : f32
    %45 = vector.broadcast %cst_13 : f32 to vector<1x128xf32>
    %46 = arith.subf %45, %44 : vector<1x128xf32>
    %47 = arith.mulf %43, %46 : vector<1x128xf32>
    %cst_14 = arith.constant 0.000000e+00 : f32
    %48 = vector.shape_cast %47 : vector<1x128xf32> to vector<1x128xf32>
    %49 = vector.broadcast %48 : vector<1x128xf32> to vector<8x128xf32>
    %50 = vector.broadcast %cst_14 : f32 to vector<8x128xf32>
    %51 = arith.select %40, %49, %50 : vector<8x128xi1>, vector<8x128xf32>
    %52 = arith.addf %29, %51 : vector<8x128xf32>
    %53 = arith.addf %30, %47 : vector<1x128xf32>
    %cst_15 = arith.constant 0x7F800000 : f32
    %54 = vector.broadcast %cst_15 : f32 to vector<8x128xf32>
    %55 = arith.select %40, %54, %27 : vector<8x128xi1>, vector<8x128xf32>
    %cst_16 = arith.constant dense<0x7F800000> : vector<128xf32>
    %56 = vector.multi_reduction <minimumf>, %55, %cst_16 [0] : vector<8x128xf32> to vector<128xf32>
    %57 = vector.shape_cast %56 : vector<128xf32> to vector<1x128xf32>
    %58 = vector.broadcast %57 : vector<1x128xf32> to vector<8x128xf32>
    %59 = arith.cmpf oeq, %55, %58 : vector<8x128xf32>
    %c8_i32_17 = arith.constant 8 : i32
    %60 = vector.broadcast %c8_i32_17 : i32 to vector<8x128xi32>
    %61 = arith.select %59, %28, %60 : vector<8x128xi1>, vector<8x128xi32>
    %cst_18 = arith.constant dense<2147483647> : vector<128xi32>
    %62 = vector.multi_reduction <minsi>, %61, %cst_18 [0] : vector<8x128xi32> to vector<128xi32>
    %63 = vector.shape_cast %62 : vector<128xi32> to vector<1x128xi32>
    %64 = vector.broadcast %63 : vector<1x128xi32> to vector<8x128xi32>
    %65 = arith.cmpi eq, %28, %64 : vector<8x128xi32>
    %cst_19 = arith.constant 9.99999993E-9 : f32
    %66 = vector.broadcast %cst_19 : f32 to vector<1x128xf32>
    %67 = arith.addf %57, %66 : vector<1x128xf32>
    %68 = tpu.reciprocal %67 {approx = true} : vector<1x128xf32> -> vector<1x128xf32>
    %69 = arith.mulf %67, %68 : vector<1x128xf32>
    %cst_20 = arith.constant 2.000000e+00 : f32
    %70 = vector.broadcast %cst_20 : f32 to vector<1x128xf32>
    %71 = arith.subf %70, %69 : vector<1x128xf32>
    %72 = arith.mulf %68, %71 : vector<1x128xf32>
    %cst_21 = arith.constant 0.000000e+00 : f32
    %73 = vector.shape_cast %72 : vector<1x128xf32> to vector<1x128xf32>
    %74 = vector.broadcast %73 : vector<1x128xf32> to vector<8x128xf32>
    %75 = vector.broadcast %cst_21 : f32 to vector<8x128xf32>
    %76 = arith.select %65, %74, %75 : vector<8x128xi1>, vector<8x128xf32>
    %77 = arith.addf %52, %76 : vector<8x128xf32>
    %78 = arith.addf %53, %72 : vector<1x128xf32>
    %cst_22 = arith.constant 0x7F800000 : f32
    %79 = vector.broadcast %cst_22 : f32 to vector<8x128xf32>
    %80 = arith.select %65, %79, %55 : vector<8x128xi1>, vector<8x128xf32>
    %cst_23 = arith.constant dense<0x7F800000> : vector<128xf32>
    %81 = vector.multi_reduction <minimumf>, %80, %cst_23 [0] : vector<8x128xf32> to vector<128xf32>
    %82 = vector.shape_cast %81 : vector<128xf32> to vector<1x128xf32>
    %83 = vector.broadcast %82 : vector<1x128xf32> to vector<8x128xf32>
    %84 = arith.cmpf oeq, %80, %83 : vector<8x128xf32>
    %c8_i32_24 = arith.constant 8 : i32
    %85 = vector.broadcast %c8_i32_24 : i32 to vector<8x128xi32>
    %86 = arith.select %84, %28, %85 : vector<8x128xi1>, vector<8x128xi32>
    %cst_25 = arith.constant dense<2147483647> : vector<128xi32>
    %87 = vector.multi_reduction <minsi>, %86, %cst_25 [0] : vector<8x128xi32> to vector<128xi32>
    %88 = vector.shape_cast %87 : vector<128xi32> to vector<1x128xi32>
    %89 = vector.broadcast %88 : vector<1x128xi32> to vector<8x128xi32>
    %90 = arith.cmpi eq, %28, %89 : vector<8x128xi32>
    %cst_26 = arith.constant 9.99999993E-9 : f32
    %91 = vector.broadcast %cst_26 : f32 to vector<1x128xf32>
    %92 = arith.addf %82, %91 : vector<1x128xf32>
    %93 = tpu.reciprocal %92 {approx = true} : vector<1x128xf32> -> vector<1x128xf32>
    %94 = arith.mulf %92, %93 : vector<1x128xf32>
    %cst_27 = arith.constant 2.000000e+00 : f32
    %95 = vector.broadcast %cst_27 : f32 to vector<1x128xf32>
    %96 = arith.subf %95, %94 : vector<1x128xf32>
    %97 = arith.mulf %93, %96 : vector<1x128xf32>
    %cst_28 = arith.constant 0.000000e+00 : f32
    %98 = vector.shape_cast %97 : vector<1x128xf32> to vector<1x128xf32>
    %99 = vector.broadcast %98 : vector<1x128xf32> to vector<8x128xf32>
    %100 = vector.broadcast %cst_28 : f32 to vector<8x128xf32>
    %101 = arith.select %90, %99, %100 : vector<8x128xi1>, vector<8x128xf32>
    %102 = arith.addf %77, %101 : vector<8x128xf32>
    %103 = arith.addf %78, %97 : vector<1x128xf32>
    %104 = tpu.reciprocal %103 {approx = true} : vector<1x128xf32> -> vector<1x128xf32>
    %105 = arith.mulf %103, %104 : vector<1x128xf32>
    %cst_29 = arith.constant 2.000000e+00 : f32
    %106 = vector.broadcast %cst_29 : f32 to vector<1x128xf32>
    %107 = arith.subf %106, %105 : vector<1x128xf32>
    %108 = arith.mulf %104, %107 : vector<1x128xf32>
    %109 = vector.broadcast %108 : vector<1x128xf32> to vector<8x128xf32>
    %110 = arith.mulf %102, %109 : vector<8x128xf32>
    %111 = tpu.concatenate %5, %110 in 0 : vector<8x128xf32>, vector<8x128xf32> -> vector<16x128xf32>
    %c0_30 = arith.constant 0 : index
    %c0_31 = arith.constant 0 : index
    %c0_32 = arith.constant 0 : index
    %112 = vector.load %arg5[%c0_30, %c0_31, %c0_32] : memref<1x32x16xf32, #tpu.memory_space<vmem>>, vector<1x32x16xf32>
    %113 = vector.shape_cast %112 : vector<1x32x16xf32> to vector<32x16xf32>
    %cst_33 = arith.constant dense<0.000000e+00> : vector<32x128xf32>
    %114 = tpu.matmul %113, %111, %cst_33 {dimension_numbers = #tpu.dot_dimension_numbers<[1], [0], [0], [1], [0, 0, 1, 1], [], []>} : vector<32x16xf32>, vector<16x128xf32>, vector<32x128xf32> -> vector<32x128xf32>
    %c0_34 = arith.constant 0 : index
    %c0_35 = arith.constant 0 : index
    %115 = vector.load %arg6[%c0_34, %c0_35] : memref<32x1xf32, #tpu.memory_space<vmem>>, vector<32x1xf32>
    %116 = vector.broadcast %115 : vector<32x1xf32> to vector<32x128xf32>
    %117 = arith.addf %114, %116 : vector<32x128xf32>
    %cst_36 = arith.constant 0.000000e+00 : f32
    %118 = vector.broadcast %cst_36 : f32 to vector<32x128xf32>
    %119 = arith.maximumf %117, %118 : vector<32x128xf32>
    %c0_37 = arith.constant 0 : index
    %c0_38 = arith.constant 0 : index
    %120 = vector.load %arg7[%c0_37, %c0_38] : memref<16x32xf32, #tpu.memory_space<vmem>>, vector<16x32xf32>
    %c0_39 = arith.constant 0 : index
    %c0_40 = arith.constant 0 : index
    %121 = vector.load %arg8[%c0_39, %c0_40] : memref<16x1xf32, #tpu.memory_space<vmem>>, vector<16x1xf32>
    %cst_41 = arith.constant dense<0.000000e+00> : vector<16x128xf32>
    %122 = tpu.matmul %120, %119, %cst_41 {dimension_numbers = #tpu.dot_dimension_numbers<[1], [0], [0], [1], [0, 0, 1, 1], [], []>} : vector<16x32xf32>, vector<32x128xf32>, vector<16x128xf32> -> vector<16x128xf32>
    %123 = vector.broadcast %121 : vector<16x1xf32> to vector<16x128xf32>
    %124 = arith.addf %122, %123 : vector<16x128xf32>
    %cst_42 = arith.constant 0.000000e+00 : f32
    %125 = vector.broadcast %cst_42 : f32 to vector<16x128xf32>
    %126 = arith.maximumf %124, %125 : vector<16x128xf32>
    %c0_43 = arith.constant 0 : index
    %c0_44 = arith.constant 0 : index
    %c0_45 = arith.constant 0 : index
    %127 = vector.load %arg9[%c0_43, %c0_44, %c0_45] : memref<1x16x128xf32, #tpu.memory_space<vmem>>, vector<1x16x128xf32>
    %128 = vector.shape_cast %127 : vector<1x16x128xf32> to vector<16x128xf32>
    %129 = vector.shape_cast %126 : vector<16x128xf32> to vector<1x16x128xf32>
    tpu.vector_store %arg9[%c0_43, %c0_44, %c0_45], %129 {strides = array<i32>} : memref<1x16x128xf32, #tpu.memory_space<vmem>>, vector<1x16x128xf32>,
    return
  }
  func.func @transform_0(%arg0: i32, %arg1: i32) -> (i32, i32, i32) {
    %c0_i32 = arith.constant 0 : i32
    %c0_i32_0 = arith.constant 0 : i32
    %c0_i32_1 = arith.constant 0 : i32
    return %arg0, %c0_i32, %c0_i32_0 : i32, i32, i32
  }
  func.func @transform_1(%arg0: i32, %arg1: i32) -> (i32, i32, i32) {
    %c0_i32 = arith.constant 0 : i32
    %c0_i32_0 = arith.constant 0 : i32
    return %arg0, %c0_i32, %arg1 : i32, i32, i32
  }
  func.func @transform_2(%arg0: i32, %arg1: i32) -> (i32, i32, i32) {
    %c0_i32 = arith.constant 0 : i32
    %c0_i32_0 = arith.constant 0 : i32
    return %arg0, %c0_i32, %arg1 : i32, i32, i32
  }
  func.func @transform_3(%arg0: i32, %arg1: i32) -> (i32, i32, i32) {
    %c0_i32 = arith.constant 0 : i32
    %c0_i32_0 = arith.constant 0 : i32
    %c0_i32_1 = arith.constant 0 : i32
    return %arg0, %c0_i32, %c0_i32_0 : i32, i32, i32
  }
  func.func @transform_4(%arg0: i32, %arg1: i32) -> (i32, i32) {
    %c0_i32 = arith.constant 0 : i32
    %c0_i32_0 = arith.constant 0 : i32
    %c0_i32_1 = arith.constant 0 : i32
    return %c0_i32, %c0_i32_0 : i32, i32
  }
  func.func @transform_5(%arg0: i32, %arg1: i32) -> (i32, i32) {
    %c0_i32 = arith.constant 0 : i32
    %c0_i32_0 = arith.constant 0 : i32
    %c0_i32_1 = arith.constant 0 : i32
    return %c0_i32, %c0_i32_0 : i32, i32
  }
  func.func @transform_6(%arg0: i32, %arg1: i32) -> (i32, i32) {
    %c0_i32 = arith.constant 0 : i32
    %c0_i32_0 = arith.constant 0 : i32
    %c0_i32_1 = arith.constant 0 : i32
    return %c0_i32, %c0_i32_0 : i32, i32
  }
  func.func @transform_7(%arg0: i32, %arg1: i32) -> (i32, i32, i32) {
    %c0_i32 = arith.constant 0 : i32
    %c0_i32_0 = arith.constant 0 : i32
    return %arg0, %c0_i32, %arg1 : i32, i32, i32
  }
}

</mosaic_0001>

<llo_original>
// kernel: tpu_custom_call.1
$region0: #{tpu_custom_call.1}
  #allocation0 [shape = 'u32[]', space=smem, size = 0x4, offset = 0x4, fixed_abs, tag = 'smem constant byte address 0x4 - core index']
  #allocation1 [shape = 'u32[144,128]{1,0:T(1,128)}', space=vmem, size = 0x12000, scoped, tag = 'internal scratch']
  %s0 = inlined_call_operand.vmem [shape: f32[2,8,3], index: 0, kind: input, shape index: {}]
  %s1 = inlined_call_operand.vmem [shape: f32[2,3,256], index: 1, kind: input, shape index: {}]
  %s2 = inlined_call_operand.vmem [shape: f32[2,8,256], index: 2, kind: input, shape index: {}]
  %s3 = inlined_call_operand.vmem [shape: f32[2,32,16], index: 3, kind: input, shape index: {}]
  %s4 = inlined_call_operand.vmem [shape: f32[32,1], index: 4, kind: input, shape index: {}]
  %s5 = inlined_call_operand.vmem [shape: f32[16,32], index: 5, kind: input, shape index: {}]
  %s6 = inlined_call_operand.vmem [shape: f32[16,1], index: 6, kind: input, shape index: {}]
  %s7 = inlined_call_operand.hbm [shape: f32[2,16,256], index: 7, kind: output, shape index: {}]
  %s8 = sld [smem:[#allocation0]]
  $region61: #{tpu_custom_call.1} parent=0
    _
  %s10 = ssub.s32 1, %s8
  %s11 = scalar_select 0, %s10, %s8
  $region1: #{tpu_custom_call.1} parent=0
    #allocation2 [shape = 'u8[16384]{0}', space=vmem, size = 0x4000, scoped, tag = 'output window, operand 0']
    #allocation3 [shape = 's32[2]{0}', space=sflag, size = 0x8, scoped, tag = 'scoped memory for tpu_custom_call.1']
    %12 = vsyncpa [#allocation3], 0
    %s13 = scalar_lea.sflag [#allocation3], 1
    %14 = vsyncpa %s13, 0
    loop: start=0, step=1, limit=6
    $region2: #{tpu_custom_call.1} parent=1 // loop_pre_header
      _
    $region3: #{tpu_custom_call.1} parent=1 // loop_header
      %s16 = sphi 0, %s20
      %p17 = scmp.ge.s32.totalorder %s16, 6
      %s23 = sphi 0, %s35
      %s24 = sphi 0, %s31
      %s25 = sphi 0, %s23
      %s26 = sphi 0, %s24
      %s27 = sphi 0, %s25
      %s28 = sphi 0, %s26
      %s38 = sphi 0, %s40
      %s41 = sphi 0, %s38
      %s42 = sphi 0, %s41
      %s58 = sphi 0, %s42
      %s66 = sphi 0, %s68
      %s69 = sphi 0, %s66
      %s70 = sphi 0, %s69
      %s86 = sphi 0, %s70
      %s94 = sphi 0, %s96
      %s97 = sphi 0, %s94
      %s98 = sphi 0, %s97
      %s114 = sphi 0, %s98
      %s120 = sphi 0, %s122
      %s123 = sphi 0, %s120
      %s124 = sphi 0, %s123
      %s140 = sphi 0, %s124
      %s144 = sphi 0, %s144
      %s146 = sphi 0, %s144
      %s147 = sphi 0, %s146
      %s161 = sphi 0, %s147
      %s165 = sphi 0, %s165
      %s167 = sphi 0, %s165
      %s168 = sphi 0, %s167
      %s182 = sphi 0, %s168
      %s186 = sphi 0, %s186
      %s188 = sphi 0, %s186
      %s189 = sphi 0, %s188
      %s203 = sphi 0, %s189
      %s211 = sphi 0, %s213
      %s214 = sphi 0, %s211
      %s215 = sphi 0, %s214
      %s231 = sphi 0, %s215
    $region4: #{tpu_custom_call.1} parent=1 // loop_header_branch
      %19 = sbr.rel (%p17) target = $region8
    $region5: #{tpu_custom_call.1} parent=1 // loop_body
      %s21 = ssub.s32 %s16, 1
      %s22 = ssub.s32 %s16, 2
      %s29 = sadd.s32 1, %s24
      %p30 = scmp.ge.s32.totalorder %s29, 2
      %s31 = scalar_select %p30, 0, %s29
      %s32 = sadd.s32 1, %s23
      %s33 = scalar_select %p30, %s32, %s23
      %p34 = scmp.ge.s32.totalorder %s33, 2
      %s35 = scalar_select %p34, 0, %s33
      %s36 = ssub.s32 %s23, %s35
      %p37 = scmp.eq.s32.totalorder %s36, 0
      %s39 = sadd.s32 %s38, 1
      %s40 = scalar_select %p37, %s38, %s39
      %p43 = pneg %p37
      %p44 = scmp.eq.s32.totalorder %s16, 3
      %p45 = por %p43, %p44
      %p46 = scmp.ne.s32.totalorder %s38, %s41
      %p47 = scmp.eq.s32.totalorder %s16, 0
      %p48 = por %p46, %p47
      %p49 = scmp.ne.s32.totalorder %s38, %s41
      %p50 = scmp.eq.s32.totalorder %s21, 3
      %p51 = por %p49, %p50
      %p52 = scmp.ne.s32.totalorder %s41, %s42
      %p53 = scmp.eq.s32.totalorder %s21, 0
      %p54 = por %p52, %p53
      %p55 = scmp.ne.s32.totalorder %s41, %s42
      %p56 = scmp.eq.s32.totalorder %s22, 3
      %p57 = por %p55, %p56
      %p59 = scmp.ne.s32.totalorder %s42, %s58
      %p60 = scmp.eq.s32.totalorder %s22, 0
      %p61 = por %p59, %p60
      %s62 = ssub.s32 %s23, %s35
      %s63 = ssub.s32 %s24, %s31
      %s64 = sor.u32 %s62, %s63
      %p65 = scmp.eq.s32.totalorder %s64, 0
      %s67 = sadd.s32 %s66, 1
      %s68 = scalar_select %p65, %s66, %s67
      %p71 = pneg %p65
      %p72 = scmp.eq.s32.totalorder %s16, 3
      %p73 = por %p71, %p72
      %p74 = scmp.ne.s32.totalorder %s66, %s69
      %p75 = scmp.eq.s32.totalorder %s16, 0
      %p76 = por %p74, %p75
      %p77 = scmp.ne.s32.totalorder %s66, %s69
      %p78 = scmp.eq.s32.totalorder %s21, 3
      %p79 = por %p77, %p78
      %p80 = scmp.ne.s32.totalorder %s69, %s70
      %p81 = scmp.eq.s32.totalorder %s21, 0
      %p82 = por %p80, %p81
      %p83 = scmp.ne.s32.totalorder %s69, %s70
      %p84 = scmp.eq.s32.totalorder %s22, 3
      %p85 = por %p83, %p84
      %p87 = scmp.ne.s32.totalorder %s70, %s86
      %p88 = scmp.eq.s32.totalorder %s22, 0
      %p89 = por %p87, %p88
      %s90 = ssub.s32 %s23, %s35
      %s91 = ssub.s32 %s24, %s31
      %s92 = sor.u32 %s90, %s91
      %p93 = scmp.eq.s32.totalorder %s92, 0
      %s95 = sadd.s32 %s94, 1
      %s96 = scalar_select %p93, %s94, %s95
      %p99 = pneg %p93
      %p100 = scmp.eq.s32.totalorder %s16, 3
      %p101 = por %p99, %p100
      %p102 = scmp.ne.s32.totalorder %s94, %s97
      %p103 = scmp.eq.s32.totalorder %s16, 0
      %p104 = por %p102, %p103
      %p105 = scmp.ne.s32.totalorder %s94, %s97
      %p106 = scmp.eq.s32.totalorder %s21, 3
      %p107 = por %p105, %p106
      %p108 = scmp.ne.s32.totalorder %s97, %s98
      %p109 = scmp.eq.s32.totalorder %s21, 0
      %p110 = por %p108, %p109
      %p111 = scmp.ne.s32.totalorder %s97, %s98
      %p112 = scmp.eq.s32.totalorder %s22, 3
      %p113 = por %p111, %p112
      %p115 = scmp.ne.s32.totalorder %s98, %s114
      %p116 = scmp.eq.s32.totalorder %s22, 0
      %p117 = por %p115, %p116
      %s118 = ssub.s32 %s23, %s35
      %p119 = scmp.eq.s32.totalorder %s118, 0
      %s121 = sadd.s32 %s120, 1
      %s122 = scalar_select %p119, %s120, %s121
      %p125 = pneg %p119
      %p126 = scmp.eq.s32.totalorder %s16, 3
      %p127 = por %p125, %p126
      %p128 = scmp.ne.s32.totalorder %s120, %s123
      %p129 = scmp.eq.s32.totalorder %s16, 0
      %p130 = por %p128, %p129
      %p131 = scmp.ne.s32.totalorder %s120, %s123
      %p132 = scmp.eq.s32.totalorder %s21, 3
      %p133 = por %p131, %p132
      %p134 = scmp.ne.s32.totalorder %s123, %s124
      %p135 = scmp.eq.s32.totalorder %s21, 0
      %p136 = por %p134, %p135
      %p137 = scmp.ne.s32.totalorder %s123, %s124
      %p138 = scmp.eq.s32.totalorder %s22, 3
      %p139 = por %p137, %p138
      %p141 = scmp.ne.s32.totalorder %s124, %s140
      %p142 = scmp.eq.s32.totalorder %s22, 0
      %p143 = por %p141, %p142
      %s145 = sadd.s32 %s144, 1
      %p148 = scmp.eq.s32.totalorder %s16, 3
      %p149 = scmp.ne.s32.totalorder %s144, %s146
      %p150 = scmp.eq.s32.totalorder %s16, 0
      %p151 = por %p149, %p150
      %p152 = scmp.ne.s32.totalorder %s144, %s146
      %p153 = scmp.eq.s32.totalorder %s21, 3
      %p154 = por %p152, %p153
      %p155 = scmp.ne.s32.totalorder %s146, %s147
      %p156 = scmp.eq.s32.totalorder %s21, 0
      %p157 = por %p155, %p156
      %p158 = scmp.ne.s32.totalorder %s146, %s147
      %p159 = scmp.eq.s32.totalorder %s22, 3
      %p160 = por %p158, %p159
      %p162 = scmp.ne.s32.totalorder %s147, %s161
      %p163 = scmp.eq.s32.totalorder %s22, 0
      %p164 = por %p162, %p163
      %s166 = sadd.s32 %s165, 1
      %p169 = scmp.eq.s32.totalorder %s16, 3
      %p170 = scmp.ne.s32.totalorder %s165, %s167
      %p171 = scmp.eq.s32.totalorder %s16, 0
      %p172 = por %p170, %p171
      %p173 = scmp.ne.s32.totalorder %s165, %s167
      %p174 = scmp.eq.s32.totalorder %s21, 3
      %p175 = por %p173, %p174
      %p176 = scmp.ne.s32.totalorder %s167, %s168
      %p177 = scmp.eq.s32.totalorder %s21, 0
      %p178 = por %p176, %p177
      %p179 = scmp.ne.s32.totalorder %s167, %s168
      %p180 = scmp.eq.s32.totalorder %s22, 3
      %p181 = por %p179, %p180
      %p183 = scmp.ne.s32.totalorder %s168, %s182
      %p184 = scmp.eq.s32.totalorder %s22, 0
      %p185 = por %p183, %p184
      %s187 = sadd.s32 %s186, 1
      %p190 = scmp.eq.s32.totalorder %s16, 3
      %p191 = scmp.ne.s32.totalorder %s186, %s188
      %p192 = scmp.eq.s32.totalorder %s16, 0
      %p193 = por %p191, %p192
      %p194 = scmp.ne.s32.totalorder %s186, %s188
      %p195 = scmp.eq.s32.totalorder %s21, 3
      %p196 = por %p194, %p195
      %p197 = scmp.ne.s32.totalorder %s188, %s189
      %p198 = scmp.eq.s32.totalorder %s21, 0
      %p199 = por %p197, %p198
      %p200 = scmp.ne.s32.totalorder %s188, %s189
      %p201 = scmp.eq.s32.totalorder %s22, 3
      %p202 = por %p200, %p201
      %p204 = scmp.ne.s32.totalorder %s189, %s203
      %p205 = scmp.eq.s32.totalorder %s22, 0
      %p206 = por %p204, %p205
      %s207 = ssub.s32 %s23, %s35
      %s208 = ssub.s32 %s24, %s31
      %s209 = sor.u32 %s207, %s208
      %p210 = scmp.eq.s32.totalorder %s209, 0
      %s212 = sadd.s32 %s211, 1
      %s213 = scalar_select %p210, %s211, %s212
      %p216 = pneg %p210
      %p217 = scmp.eq.s32.totalorder %s16, 3
      %p218 = por %p216, %p217
      %p219 = scmp.ne.s32.totalorder %s211, %s214
      %p220 = scmp.eq.s32.totalorder %s16, 0
      %p221 = por %p219, %p220
      %p222 = scmp.ne.s32.totalorder %s211, %s214
      %p223 = scmp.eq.s32.totalorder %s21, 3
      %p224 = por %p222, %p223
      %p225 = scmp.ne.s32.totalorder %s214, %s215
      %p226 = scmp.eq.s32.totalorder %s21, 0
      %p227 = por %p225, %p226
      %p228 = scmp.ne.s32.totalorder %s214, %s215
      %p229 = scmp.eq.s32.totalorder %s22, 3
      %p230 = por %p228, %p229
      %p232 = scmp.ne.s32.totalorder %s215, %s231
      %p233 = scmp.eq.s32.totalorder %s22, 0
      %p234 = por %p232, %p233
      %p235 = scmp.le.s32.totalorder 1, %s16
      %p236 = scmp.lt.s32.totalorder %s16, 5
      %p237 = pnand %p235, %p236
      %p238 = pneg %p237
      // Predicated region
      $region9: #{tpu_custom_call.1} parent=5 // pred_check
        _
      $region10: #{tpu_custom_call.1} parent=5 // pred_check_branch
        %240 = sbr.rel (%p237) target = $region12
      $region11: #{tpu_custom_call.1} parent=5 // pred_region
        %s241 = ssub.s32 %s16, 1
        // Predicated region
        $region13: #{tpu_custom_call.1} parent=11 // pred_check
          %p242 = pneg %p157
        $region14: #{tpu_custom_call.1} parent=11 // pred_check_branch
          %244 = sbr.rel (%p242) target = $region16
        $region15: #{tpu_custom_call.1} parent=11 // pred_region
          _
        $region16: #{tpu_custom_call.1} parent=11 // pred_fallthru
          _
        // Predicated region
        $region17: #{tpu_custom_call.1} parent=11 // pred_check
          %p245 = pneg %p178
        $region18: #{tpu_custom_call.1} parent=11 // pred_check_branch
          %247 = sbr.rel (%p245) target = $region20
        $region19: #{tpu_custom_call.1} parent=11 // pred_region
          _
        $region20: #{tpu_custom_call.1} parent=11 // pred_fallthru
          _
        // Predicated region
        $region21: #{tpu_custom_call.1} parent=11 // pred_check
          %p248 = pneg %p199
        $region22: #{tpu_custom_call.1} parent=11 // pred_check_branch
          %250 = sbr.rel (%p248) target = $region24
        $region23: #{tpu_custom_call.1} parent=11 // pred_region
          _
        $region24: #{tpu_custom_call.1} parent=11 // pred_fallthru
          _
      $region12: #{tpu_custom_call.1} parent=5 // pred_fallthru
        _
      %p251 = scmp.lt.s32.totalorder %s16, 4
      // Predicated region
      $region25: #{tpu_custom_call.1} parent=5 // pred_check
        %p252 = pneg %p251
      $region26: #{tpu_custom_call.1} parent=5 // pred_check_branch
        %254 = sbr.rel (%p252) target = $region28
      $region27: #{tpu_custom_call.1} parent=5 // pred_region
        // Predicated region
        $region29: #{tpu_custom_call.1} parent=27 // pred_check
          %p255 = pneg %p48
        $region30: #{tpu_custom_call.1} parent=27 // pred_check_branch
          %257 = sbr.rel (%p255) target = $region32
        $region31: #{tpu_custom_call.1} parent=27 // pred_region
          %p258 = scmp.lt.s32.totalorder %s23, 1
          %s259 = scalar_select %p258, %s23, 1
          %s260 = smul.addr %s259, 8
          %s261 = scalar_lea.vmem %s0, %s260
        $region32: #{tpu_custom_call.1} parent=27 // pred_fallthru
          _
        // Predicated region
        $region33: #{tpu_custom_call.1} parent=27 // pred_check
          %p262 = pneg %p76
        $region34: #{tpu_custom_call.1} parent=27 // pred_check_branch
          %264 = sbr.rel (%p262) target = $region36
        $region35: #{tpu_custom_call.1} parent=27 // pred_region
          %p265 = scmp.lt.s32.totalorder %s23, 1
          %s266 = scalar_select %p265, %s23, 1
          %p267 = scmp.lt.s32.totalorder %s24, 1
          %s268 = scalar_select %p267, %s24, 1
          %s269 = smul.addr %s266, 2
          %s270 = sadd.s32 %s268, %s269
          %s271 = smul.addr %s270, 4
          %s272 = scalar_lea.vmem %s1, %s271
        $region36: #{tpu_custom_call.1} parent=27 // pred_fallthru
          _
        // Predicated region
        $region37: #{tpu_custom_call.1} parent=27 // pred_check
          %p273 = pneg %p104
        $region38: #{tpu_custom_call.1} parent=27 // pred_check_branch
          %275 = sbr.rel (%p273) target = $region40
        $region39: #{tpu_custom_call.1} parent=27 // pred_region
          %p276 = scmp.lt.s32.totalorder %s23, 1
          %s277 = scalar_select %p276, %s23, 1
          %p278 = scmp.lt.s32.totalorder %s24, 1
          %s279 = scalar_select %p278, %s24, 1
          %s280 = smul.addr %s277, 2
          %s281 = sadd.s32 %s279, %s280
          %s282 = smul.addr %s281, 8
          %s283 = scalar_lea.vmem %s2, %s282
        $region40: #{tpu_custom_call.1} parent=27 // pred_fallthru
          _
        // Predicated region
        $region41: #{tpu_custom_call.1} parent=27 // pred_check
          %p284 = pneg %p130
        $region42: #{tpu_custom_call.1} parent=27 // pred_check_branch
          %286 = sbr.rel (%p284) target = $region44
        $region43: #{tpu_custom_call.1} parent=27 // pred_region
          %p287 = scmp.lt.s32.totalorder %s23, 1
          %s288 = scalar_select %p287, %s23, 1
          %s289 = smul.addr %s288, 4
          %s290 = smul.addr %s289, 8
          %s291 = scalar_lea.vmem %s3, %s290
        $region44: #{tpu_custom_call.1} parent=27 // pred_fallthru
          _
      $region28: #{tpu_custom_call.1} parent=5 // pred_fallthru
        _
      %p292 = scmp.le.s32.totalorder 1, %s16
      %p293 = scmp.lt.s32.totalorder %s16, 5
      %p294 = pnand %p292, %p293
      %p295 = pneg %p294
      // Predicated region
      $region45: #{tpu_custom_call.1} parent=5 // pred_check
        _
      $region46: #{tpu_custom_call.1} parent=5 // pred_check_branch
        %297 = sbr.rel (%p294) target = $region48
      $region47: #{tpu_custom_call.1} parent=5 // pred_region
        %s298 = ssub.s32 %s16, 1
        %p299 = scmp.lt.s32.totalorder %s25, 1
        %s300 = scalar_select %p299, %s25, 1
        %s301 = smul.addr %s300, 8
        %s302 = scalar_lea.vmem %s0, %s301
        %p303 = pneg %p54
        %p304 = pneg %p51
        %p305 = scmp.lt.s32.totalorder %s25, 1
        %s306 = scalar_select %p305, %s25, 1
        %p307 = scmp.lt.s32.totalorder %s26, 1
        %s308 = scalar_select %p307, %s26, 1
        %s309 = smul.addr %s306, 2
        %s310 = sadd.s32 %s308, %s309
        %s311 = smul.addr %s310, 4
        %s312 = scalar_lea.vmem %s1, %s311
        %p313 = pneg %p82
        %p314 = pneg %p79
        %p315 = scmp.lt.s32.totalorder %s25, 1
        %s316 = scalar_select %p315, %s25, 1
        %p317 = scmp.lt.s32.totalorder %s26, 1
        %s318 = scalar_select %p317, %s26, 1
        %s319 = smul.addr %s316, 2
        %s320 = sadd.s32 %s318, %s319
        %s321 = smul.addr %s320, 8
        %s322 = scalar_lea.vmem %s2, %s321
        %p323 = pneg %p110
        %p324 = pneg %p107
        %p325 = scmp.lt.s32.totalorder %s25, 1
        %s326 = scalar_select %p325, %s25, 1
        %s327 = smul.addr %s326, 4
        %s328 = smul.addr %s327, 8
        %s329 = scalar_lea.vmem %s3, %s328
        %p330 = pneg %p136
        %p331 = pneg %p133
        %p332 = pneg %p157
        %p333 = pneg %p154
        %p334 = pneg %p178
        %p335 = pneg %p175
        %p336 = pneg %p199
        %p337 = pneg %p196
        %p338 = pneg %p227
        %p339 = pneg %p224
        %s340 = sand.u32 %s214, 1
        %s341 = scalar_lea.sflag [#allocation3], %s340
        %s342 = sand.u32 %s214, 1
        %s343 = smul.addr %s342, 16
        %s344 = scalar_lea.vmem [#allocation2], %s343
        %p345 = scmp.lt.s32.totalorder %s25, 1
        %s346 = scalar_select %p345, %s25, 1
        %s347 = smul.addr %s346, 8
        %s348 = scalar_lea.vmem %s0, %s347
        %p349 = scmp.lt.s32.totalorder %s25, 1
        %s350 = scalar_select %p349, %s25, 1
        %p351 = scmp.lt.s32.totalorder %s26, 1
        %s352 = scalar_select %p351, %s26, 1
        %s353 = smul.addr %s350, 2
        %s354 = sadd.s32 %s352, %s353
        %s355 = smul.addr %s354, 4
        %s356 = scalar_lea.vmem %s1, %s355
        %p357 = scmp.lt.s32.totalorder %s25, 1
        %s358 = scalar_select %p357, %s25, 1
        %p359 = scmp.lt.s32.totalorder %s26, 1
        %s360 = scalar_select %p359, %s26, 1
        %s361 = smul.addr %s358, 2
        %s362 = sadd.s32 %s360, %s361
        %s363 = smul.addr %s362, 8
        %s364 = scalar_lea.vmem %s2, %s363
        %p365 = scmp.lt.s32.totalorder %s25, 1
        %s366 = scalar_select %p365, %s25, 1
        %s367 = smul.addr %s366, 4
        %s368 = smul.addr %s367, 8
        %s369 = scalar_lea.vmem %s3, %s368
        %v370 = vld [vmem:[%s348] sm:$0xff]
        %v371 = vld [vmem:[%s356] sm:$0x7]
        %v372 = vld [vmem:[%s364] sm:$0xff]
        %374 = vset.pattern.permute.xlu0 0
        %375 = vperm.xlu0 %374, %v370
        %v376 = vpop.permute.xlu0 %375
        %v378 = vlaneseq
        %v379 = vshrl.u32 %v378, 7
        %v380 = vsub.s32 0, %v379
        %v381 = vrot.slane %v371, %v380
        %v382 = vsub.f32 %v376, %v381
        %v383 = vmul.f32 %v382, %v382
        %v384 = vadd.f32 %v383, 0.0
        %385 = vset.pattern.permute.xlu0 1
        %386 = vperm.xlu0 %385, %v370
        %v387 = vpop.permute.xlu0 %386
        %v389 = vlaneseq
        %v390 = vshrl.u32 %v389, 7
        %v391 = vsub.s32 1, %v390
        %v392 = vrot.slane %v371, %v391
        %v393 = vsub.f32 %v387, %v392
        %v394 = vmul.f32 %v393, %v393
        %v395 = vadd.f32 %v384, %v394
        %396 = vset.pattern.permute.xlu0 2
        %397 = vperm.xlu0 %396, %v370
        %v398 = vpop.permute.xlu0 %397
        %v400 = vlaneseq
        %v401 = vshrl.u32 %v400, 7
        %v402 = vsub.s32 2, %v401
        %v403 = vrot.slane %v371, %v402
        %v404 = vsub.f32 %v398, %v403
        %v405 = vmul.f32 %v404, %v404
        %v406 = vadd.f32 %v395, %v405
        %v407 = vlaneseq
        %v408 = vshrl.u32 %v407, 7
        %v409 = vrot.slane %v406, 4
        %v410 = vmin.f32 %v406, %v409
        %v411 = vrot.slane %v410, 2
        %v412 = vmin.f32 %v410, %v411
        %v413 = vrot.slane %v412, 1
        %v414 = vmin.f32 %v412, %v413
        %vm415 = vcmp.eq.f32.partialorder %v406, %v414
        %v416 = vsel %vm415, %v408, 8
        %v417 = vrot.slane %v416, 4
        %vm418 = vcmp.lt.s32.totalorder %v416, %v417
        %v419 = vsel %vm418, %v416, %v417
        %v420 = vrot.slane %v419, 2
        %vm421 = vcmp.lt.s32.totalorder %v419, %v420
        %v422 = vsel %vm421, %v419, %v420
        %v423 = vrot.slane %v422, 1
        %vm424 = vcmp.lt.s32.totalorder %v422, %v423
        %v425 = vsel %vm424, %v422, %v423
        %vm426 = vcmp.eq.s32.totalorder %v408, %v425
        %v427 = vadd.f32 %v414, 1e-08
        %v428 = vrcp.pop %v427
        %v429 = vmul.f32 %v427, %v428
        %v430 = vsub.f32 2.0, %v429
        %v431 = vmul.f32 %v428, %v430
        %v432 = vsel %vm426, %v431, 0.0
        %v433 = vadd.f32 %v432, 0.0
        %v434 = vadd.f32 %v431, 0.0
        %v435 = vsel %vm426, inf, %v406
        %v436 = vrot.slane %v435, 4
        %v437 = vmin.f32 %v435, %v436
        %v438 = vrot.slane %v437, 2
        %v439 = vmin.f32 %v437, %v438
        %v440 = vrot.slane %v439, 1
        %v441 = vmin.f32 %v439, %v440
        %vm442 = vcmp.eq.f32.partialorder %v435, %v441
        %v443 = vsel %vm442, %v408, 8
        %v444 = vrot.slane %v443, 4
        %vm445 = vcmp.lt.s32.totalorder %v443, %v444
        %v446 = vsel %vm445, %v443, %v444
        %v447 = vrot.slane %v446, 2
        %vm448 = vcmp.lt.s32.totalorder %v446, %v447
        %v449 = vsel %vm448, %v446, %v447
        %v450 = vrot.slane %v449, 1
        %vm451 = vcmp.lt.s32.totalorder %v449, %v450
        %v452 = vsel %vm451, %v449, %v450
        %vm453 = vcmp.eq.s32.totalorder %v408, %v452
        %v454 = vadd.f32 %v441, 1e-08
        %v455 = vrcp.pop %v454
        %v456 = vmul.f32 %v454, %v455
        %v457 = vsub.f32 2.0, %v456
        %v458 = vmul.f32 %v455, %v457
        %v459 = vsel %vm453, %v458, 0.0
        %v460 = vadd.f32 %v433, %v459
        %v461 = vadd.f32 %v434, %v458
        %v462 = vsel %vm453, inf, %v435
        %v463 = vrot.slane %v462, 4
        %v464 = vmin.f32 %v462, %v463
        %v465 = vrot.slane %v464, 2
        %v466 = vmin.f32 %v464, %v465
        %v467 = vrot.slane %v466, 1
        %v468 = vmin.f32 %v466, %v467
        %vm469 = vcmp.eq.f32.partialorder %v462, %v468
        %v470 = vsel %vm469, %v408, 8
        %v471 = vrot.slane %v470, 4
        %vm472 = vcmp.lt.s32.totalorder %v470, %v471
        %v473 = vsel %vm472, %v470, %v471
        %v474 = vrot.slane %v473, 2
        %vm475 = vcmp.lt.s32.totalorder %v473, %v474
        %v476 = vsel %vm475, %v473, %v474
        %v477 = vrot.slane %v476, 1
        %vm478 = vcmp.lt.s32.totalorder %v476, %v477
        %v479 = vsel %vm478, %v476, %v477
        %vm480 = vcmp.eq.s32.totalorder %v408, %v479
        %v481 = vadd.f32 %v468, 1e-08
        %v482 = vrcp.pop %v481
        %v483 = vmul.f32 %v481, %v482
        %v484 = vsub.f32 2.0, %v483
        %v485 = vmul.f32 %v482, %v484
        %v486 = vsel %vm480, %v485, 0.0
        %v487 = vadd.f32 %v460, %v486
        %v488 = vadd.f32 %v461, %v485
        %v489 = vrcp.pop %v488
        %v490 = vmul.f32 %v488, %v489
        %v491 = vsub.f32 2.0, %v490
        %v492 = vmul.f32 %v489, %v491
        %v493 = vmul.f32 %v487, %v492
        %v494 = vld [vmem:[%s369] sm:$0xff]
        %v495 = vld [vmem:[%s369 + $0x8] sm:$0xff]
        %v496 = vld [vmem:[%s369 + $0x10] sm:$0xff]
        %v497 = vld [vmem:[%s369 + $0x18] sm:$0xff]
        %v498 = vld [vmem:[%s4] sm:$0xff]
        %v499 = vld [vmem:[%s4 + $0x8] sm:$0xff]
        %v500 = vld [vmem:[%s4 + $0x10] sm:$0xff]
        %v501 = vld [vmem:[%s4 + $0x18] sm:$0xff]
        %503 = vset.pattern.permute.xlu0 0
        %504 = vperm.xlu0 %503, %v498
        %v505 = vpop.permute.xlu0 %504
        %508 = vset.pattern.permute.xlu0 0
        %509 = vperm.xlu0 %508, %v499
        %v510 = vpop.permute.xlu0 %509
        %513 = vset.pattern.permute.xlu0 0
        %514 = vperm.xlu0 %513, %v500
        %v515 = vpop.permute.xlu0 %514
        %518 = vset.pattern.permute.xlu0 0
        %519 = vperm.xlu0 %518, %v501
        %v520 = vpop.permute.xlu0 %519
        %vm522 = vcmask 130048
        %v524 = vsel %vm522, %v494, 0
        %v527 = vsel %vm522, %v495, 0
        %v530 = vsel %vm522, %v496, 0
        %v533 = vsel %vm522, %v497, 0
        %535 = vmatprep.subr.mxu0 0.0
        %536 = vmatpush1.msra.mxu0 %v372
        %537 = vmatprep.subr.mxu0 0.0
        %538 = vmatpush1.msra.mxu0 %v493
        %539 = vmatprep.subr.mxu0 0.0
        %540 = vmatpush1.msra.mxu0 0.0
        %541 = vmatprep.subr.mxu0 0.0
        %542 = vmatpush1.msra.mxu0 0.0
        %543 = vmatprep.subr.mxu0 0.0
        %544 = vmatpush1.msra.mxu0 0.0
        %545 = vmatprep.subr.mxu0 0.0
        %546 = vmatpush1.msra.mxu0 0.0
        %547 = vmatprep.subr.mxu0 0.0
        %548 = vmatpush1.msra.mxu0 0.0
        %549 = vmatprep.subr.mxu0 0.0
        %550 = vmatpush1.msra.mxu0 0.0
        %551 = vmatprep.subr.mxu0 0.0
        %552 = vmatpush1.msra.mxu0 0.0
        %553 = vmatprep.subr.mxu0 0.0
        %554 = vmatpush1.msra.mxu0 0.0
        %555 = vmatprep.subr.mxu0 0.0
        %556 = vmatpush1.msra.mxu0 0.0
        %557 = vmatprep.subr.mxu0 0.0
        %558 = vmatpush1.msra.mxu0 0.0
        %559 = vmatprep.subr.mxu0 0.0
        %560 = vmatpush1.msra.mxu0 0.0
        %561 = vmatprep.subr.mxu0 0.0
        %562 = vmatpush1.msra.mxu0 0.0
        %563 = vmatprep.subr.mxu0 0.0
        %564 = vmatpush1.msra.mxu0 0.0
        %565 = vmatprep.subr.mxu0 0.0
        %566 = vmatpush1.msra.mxu0 0.0
        %567 = vmatprep.subr.mxu0 0.0
        %568 = vmatpush1.msra.mxu0 0.0
        %569 = vmatprep.subr.mxu0 0.0
        %570 = vmatpush1.msra.mxu0 0.0
        %571 = vmatprep.subr.mxu0 0.0
        %572 = vmatpush1.msra.mxu0 0.0
        %573 = vmatprep.subr.mxu0 0.0
        %574 = vmatpush1.msra.mxu0 0.0
        %575 = vmatprep.subr.mxu0 0.0
        %576 = vmatpush1.msra.mxu0 0.0
        %577 = vmatprep.subr.mxu0 0.0
        %578 = vmatpush1.msra.mxu0 0.0
        %579 = vmatprep.subr.mxu0 0.0
        %580 = vmatpush1.msra.mxu0 0.0
        %581 = vmatprep.subr.mxu0 0.0
        %582 = vmatpush1.msra.mxu0 0.0
        %583 = vmatprep.subr.mxu0 0.0
        %584 = vmatpush1.msra.mxu0 0.0
        %585 = vmatprep.subr.mxu0 0.0
        %586 = vmatpush1.msra.mxu0 0.0
        %587 = vmatprep.subr.mxu0 0.0
        %588 = vmatpush1.msra.mxu0 0.0
        %589 = vmatprep.subr.mxu0 0.0
        %590 = vmatpush1.msra.mxu0 0.0
        %591 = vmatprep.subr.mxu0 0.0
        %592 = vmatpush1.msra.mxu0 0.0
        %593 = vmatprep.subr.mxu0 0.0
        %594 = vmatpush1.msra.mxu0 0.0
        %595 = vmatprep.subr.mxu0 0.0
        %596 = vmatpush1.msra.mxu0 0.0
        %597 = vmatprep.subr.mxu0 0.0
        %598 = vmatpush1.msra.mxu0 0.0
        %599 = vmatprep.mubr.f32.mxu0 0.0
        %600 = vmatmul.mubr.f32.gmra.mrb[0].mxu0 %v524
        %v601 = vpop.f32.mrb[0].mxu0
        %v602 = vadd.f32 %v505, %v601
        %v603 = vpop.f32.mrb[0].mxu0
        %604 = vmatprep.mubr.f32.mxu0 0.0
        %605 = vmatmul.mubr.f32.gmra.mrb[0].mxu0 %v527
        %v606 = vpop.f32.mrb[0].mxu0
        %v607 = vadd.f32 %v510, %v606
        %v608 = vpop.f32.mrb[0].mxu0
        %609 = vmatprep.mubr.f32.mxu0 0.0
        %610 = vmatmul.mubr.f32.gmra.mrb[0].mxu0 %v530
        %v611 = vpop.f32.mrb[0].mxu0
        %v612 = vadd.f32 %v515, %v611
        %v613 = vpop.f32.mrb[0].mxu0
        %614 = vmatprep.mubr.f32.mxu0 0.0
        %615 = vmatmul.mubr.f32.gmra.mrb[0].mxu0 %v533
        %v616 = vpop.f32.mrb[0].mxu0
        %v617 = vadd.f32 %v520, %v616
        %v618 = vpop.f32.mrb[0].mxu0
        %619 = vdwg.mxu0
        %v620 = vmax.f32 %v602, 0.0
        %v621 = vmax.f32 %v607, 0.0
        %v622 = vmax.f32 %v612, 0.0
        %v623 = vmax.f32 %v617, 0.0
        %v624 = vld [vmem:[%s5] sm:$0xff]
        %v625 = vld [vmem:[%s5 + $0x8] sm:$0xff]
        %v626 = vld [vmem:[%s6] sm:$0xff]
        %v627 = vld [vmem:[%s6 + $0x8] sm:$0xff]
        %629 = vset.pattern.permute.xlu0 0
        %630 = vperm.xlu0 %629, %v626
        %v631 = vpop.permute.xlu0 %630
        %634 = vset.pattern.permute.xlu0 0
        %635 = vperm.xlu0 %634, %v627
        %v636 = vpop.permute.xlu0 %635
        %vm638 = vcmask 261120
        %v640 = vsel %vm638, %v624, 0
        %v643 = vsel %vm638, %v625, 0
        %645 = vmatprep.subr.mxu0 0.0
        %646 = vmatpush1.msra.mxu0 %v620
        %647 = vmatprep.subr.mxu0 0.0
        %648 = vmatpush1.msra.mxu0 %v621
        %649 = vmatprep.subr.mxu0 0.0
        %650 = vmatpush1.msra.mxu0 %v622
        %651 = vmatprep.subr.mxu0 0.0
        %652 = vmatpush1.msra.mxu0 %v623
        %653 = vmatprep.subr.mxu0 0.0
        %654 = vmatpush1.msra.mxu0 0.0
        %655 = vmatprep.subr.mxu0 0.0
        %656 = vmatpush1.msra.mxu0 0.0
        %657 = vmatprep.subr.mxu0 0.0
        %658 = vmatpush1.msra.mxu0 0.0
        %659 = vmatprep.subr.mxu0 0.0
        %660 = vmatpush1.msra.mxu0 0.0
        %661 = vmatprep.subr.mxu0 0.0
        %662 = vmatpush1.msra.mxu0 0.0
        %663 = vmatprep.subr.mxu0 0.0
        %664 = vmatpush1.msra.mxu0 0.0
        %665 = vmatprep.subr.mxu0 0.0
        %666 = vmatpush1.msra.mxu0 0.0
        %667 = vmatprep.subr.mxu0 0.0
        %668 = vmatpush1.msra.mxu0 0.0
        %669 = vmatprep.subr.mxu0 0.0
        %670 = vmatpush1.msra.mxu0 0.0
        %671 = vmatprep.subr.mxu0 0.0
        %672 = vmatpush1.msra.mxu0 0.0
        %673 = vmatprep.subr.mxu0 0.0
        %674 = vmatpush1.msra.mxu0 0.0
        %675 = vmatprep.subr.mxu0 0.0
        %676 = vmatpush1.msra.mxu0 0.0
        %677 = vmatprep.subr.mxu0 0.0
        %678 = vmatpush1.msra.mxu0 0.0
        %679 = vmatprep.subr.mxu0 0.0
        %680 = vmatpush1.msra.mxu0 0.0
        %681 = vmatprep.subr.mxu0 0.0
        %682 = vmatpush1.msra.mxu0 0.0
        %683 = vmatprep.subr.mxu0 0.0
        %684 = vmatpush1.msra.mxu0 0.0
        %685 = vmatprep.subr.mxu0 0.0
        %686 = vmatpush1.msra.mxu0 0.0
        %687 = vmatprep.subr.mxu0 0.0
        %688 = vmatpush1.msra.mxu0 0.0
        %689 = vmatprep.subr.mxu0 0.0
        %690 = vmatpush1.msra.mxu0 0.0
        %691 = vmatprep.subr.mxu0 0.0
        %692 = vmatpush1.msra.mxu0 0.0
        %693 = vmatprep.subr.mxu0 0.0
        %694 = vmatpush1.msra.mxu0 0.0
        %695 = vmatprep.subr.mxu0 0.0
        %696 = vmatpush1.msra.mxu0 0.0
        %697 = vmatprep.subr.mxu0 0.0
        %698 = vmatpush1.msra.mxu0 0.0
        %699 = vmatprep.subr.mxu0 0.0
        %700 = vmatpush1.msra.mxu0 0.0
        %701 = vmatprep.subr.mxu0 0.0
        %702 = vmatpush1.msra.mxu0 0.0
        %703 = vmatprep.subr.mxu0 0.0
        %704 = vmatpush1.msra.mxu0 0.0
        %705 = vmatprep.subr.mxu0 0.0
        %706 = vmatpush1.msra.mxu0 0.0
        %707 = vmatprep.subr.mxu0 0.0
        %708 = vmatpush1.msra.mxu0 0.0
        %709 = vmatprep.mubr.f32.mxu0 0.0
        %710 = vmatmul.mubr.f32.gmra.mrb[0].mxu0 %v640
        %v711 = vpop.f32.mrb[0].mxu0
        %v712 = vadd.f32 %v631, %v711
        %v713 = vpop.f32.mrb[0].mxu0
        %714 = vmatprep.mubr.f32.mxu0 0.0
        %715 = vmatmul.mubr.f32.gmra.mrb[0].mxu0 %v643
        %v716 = vpop.f32.mrb[0].mxu0
        %v717 = vadd.f32 %v636, %v716
        %v718 = vpop.f32.mrb[0].mxu0
        %719 = vdwg.mxu0
        %v720 = vmax.f32 %v712, 0.0
        %v721 = vmax.f32 %v717, 0.0
        %722 = vst [vmem:[%s344] sm:$0xff] %v720
        %723 = vst [vmem:[%s344 + $0x8] sm:$0xff] %v721
        %s724 = sand.u32 %s214, 1
        %s725 = scalar_lea.sflag [#allocation3], %s724
        %s726 = sand.u32 %s214, 1
        %s727 = smul.addr %s726, 16
        %s728 = scalar_lea.vmem [#allocation2], %s727
        // Predicated region
        $region49: #{tpu_custom_call.1} parent=47 // pred_check
          %p729 = pneg %p224
        $region50: #{tpu_custom_call.1} parent=47 // pred_check_branch
          %731 = sbr.rel (%p729) target = $region52
        $region51: #{tpu_custom_call.1} parent=47 // pred_region
          %s733 = ssub.s32 256, 256
          %734 = vsyncadd %s725, %s733
          %s735 = smul.addr %s25, 4
          %s736 = sadd.s32 %s26, %s735
          %s737 = smul.addr %s736, 128
          %s738 = scalar_lea.hbm %s7, %s737
          %s739 = sshll.u32 %s728, 4
          %s740 = int_to_ptr.vmem [resolvable:$true] %s739
          %745 = dma.vmem_to_hbm [thread:$0]  %s740, 256, %s738, %s725, 128, 256, 8
        $region52: #{tpu_custom_call.1} parent=47 // pred_fallthru
          _
      $region48: #{tpu_custom_call.1} parent=5 // pred_fallthru
        _
      %p746 = scmp.le.s32.totalorder 2, %s16
      // Predicated region
      $region53: #{tpu_custom_call.1} parent=5 // pred_check
        %p747 = pneg %p746
      $region54: #{tpu_custom_call.1} parent=5 // pred_check_branch
        %749 = sbr.rel (%p747) target = $region56
      $region55: #{tpu_custom_call.1} parent=5 // pred_region
        %s750 = ssub.s32 %s16, 2
        // Predicated region
        $region57: #{tpu_custom_call.1} parent=55 // pred_check
          %p751 = pneg %p230
        $region58: #{tpu_custom_call.1} parent=55 // pred_check_branch
          %753 = sbr.rel (%p751) target = $region60
        $region59: #{tpu_custom_call.1} parent=55 // pred_region
          %s754 = sand.u32 %s215, 1
          %s755 = scalar_lea.sflag [#allocation3], %s754
          %s756 = sand.u32 %s215, 1
          %s757 = smul.addr %s756, 16
          %s758 = scalar_lea.vmem [#allocation2], %s757
          %759 = dma.done %s755, 256
        $region60: #{tpu_custom_call.1} parent=55 // pred_fallthru
          _
      $region56: #{tpu_custom_call.1} parent=5 // pred_fallthru
        _
    $region6: #{tpu_custom_call.1} parent=1 // loop_footer
      %s20 = sadd.s32 1, %s16
    $region7: #{tpu_custom_call.1} parent=1 // loop_footer_branch
      %15 = sbr.rel target = $region3
    $region8: #{tpu_custom_call.1} parent=1 // loop_exit
      _
    %760 = vsyncpa [#allocation3], 1
    %s761 = scalar_lea.sflag [#allocation3], 1
    %762 = vsyncpa %s761, 1

</llo_original>
